<compile_context>
chip_gen: v7x
topology: tpu7x:2x2x1
jax: 0.10.0
libtpu: 0.0.40
codegen_flags: <defaults>
</compile_context>

<pallas_src>
import jax
import jax.numpy as jnp
from jax.experimental import pallas as pl
from jax.experimental.pallas import tpu as pltpu

IN_FEATURES = 430
OUT_FEATURES = 3
OUT_PAD = 16        # weight rows padded to the bf16 sublane tile for the MXU
MAX_TILE_B = 4096   # rows per grid step (f32 x tile: ~7 MiB, double-buffered)
MIN_TILE_B = 256    # tile granularity (lane-aligned output blocks)


def _cdiv(a, b):
    return -(-a // b)


def _round_up(n, m):
    return ((n + m - 1) // m) * m


def _choose_tile_b(B):
    """Rows per grid step: multiple of 256, <= MAX_TILE_B, balanced across
    tiles, and at least two tiles when there is enough work so the "parallel"
    batch axis can use both TensorCores on v7x."""
    min_tiles = 2 if B >= 2 * MIN_TILE_B else 1
    n_tiles = max(min_tiles, _cdiv(B, MAX_TILE_B))
    tb = _round_up(_cdiv(B, n_tiles), MIN_TILE_B)
    return min(tb, MAX_TILE_B)


def qnet_kernel(x_ref, w_ref, b_ref, o_ref):
    # x tile: (TB, 430) in native dtype; cast to bf16 in-kernel for fast MXU
    # passes (f32 is read from HBM only once; no wrapper-side cast pass).
    x = x_ref[...].astype(jnp.bfloat16)

    # (OUT_PAD, 430) @ (TB, 430)^T -> (OUT_PAD, TB): logits in lane-dense
    # (out_features, batch) orientation, f32 accumulation on the MXU.
    logits = jax.lax.dot_general(
        w_ref[...], x,
        dimension_numbers=(((1,), (1,)), ((), ())),
        preferred_element_type=jnp.float32,
    )

    # Keep only the 3 real output rows; bias broadcasts over the batch lanes.
    act = logits[0:OUT_FEATURES, :] + b_ref[...]

    # leaky_relu (PyTorch default negative_slope = 0.01), f32 epilogue.
    act = jnp.where(act >= 0, act, 0.01 * act)

    # Numerically-stable softmax over the 3 output rows (sublane axis) —
    # fully lane-dense: ~TB/128 vregs total instead of ~TB/8 sparse ones.
    m = jnp.max(act, axis=0, keepdims=True)
    e = jnp.exp(act - m)
    denom = jnp.sum(e, axis=0, keepdims=True)
    o_ref[...] = (e / denom).astype(o_ref.dtype)


def qnet_forward(x, w, b):
    """x: (B, 430); w: (3, 430) PyTorch layout; b: (3,) -> (B, 3) probs."""
    B = x.shape[0]
    TB = _choose_tile_b(B)
    grid = (_cdiv(B, TB),)

    # Tiny per-call prep (fuses under jit): padded bf16 weight, column bias.
    w_pad = jnp.zeros((OUT_PAD, IN_FEATURES), jnp.bfloat16)
    w_pad = w_pad.at[:OUT_FEATURES, :].set(w.astype(jnp.bfloat16))
    b_col = b.astype(jnp.float32).reshape(OUT_FEATURES, 1)

    out_t = pl.pallas_call(
        qnet_kernel,
        out_shape=jax.ShapeDtypeStruct((OUT_FEATURES, B), jnp.float32),
        grid_spec=pltpu.PrefetchScalarGridSpec(
            num_scalar_prefetch=0,
            grid=grid,
            in_specs=[
                # x: one (TB, 430) tile per step -> pipelined DMA (ragged last
                # block handled by Pallas; no wrapper padding pass).
                pl.BlockSpec((TB, IN_FEATURES), lambda i: (i, 0)),
                # weight & bias: constant index_map -> resident across steps.
                pl.BlockSpec((OUT_PAD, IN_FEATURES), lambda i: (0, 0)),
                pl.BlockSpec((OUT_FEATURES, 1), lambda i: (0, 0)),
            ],
            # Lane-dense output blocks: (3, TB) with TB a multiple of 256.
            out_specs=pl.BlockSpec((OUT_FEATURES, TB), lambda i: (0, i)),
        ),
        compiler_params=pltpu.CompilerParams(
            dimension_semantics=("parallel",),    # shard batch tiles over TCs
            vmem_limit_bytes=32 * 1024 * 1024,    # above v5e's 16 MiB default
        ),
    )(x, w_pad, b_col)

    # Tiny (3, B) -> (B, 3) transpose so callers see the PyTorch layout.
    return out_t.T


def init_params(key):
    # nn.Linear default init: U(-1/sqrt(fan_in), +1/sqrt(fan_in)),
    # weight stored PyTorch-style as (out_features, in_features).
    kw, kb = jax.random.split(key)
    bound = 1.0 / (IN_FEATURES ** 0.5)
    w = jax.random.uniform(kw, (OUT_FEATURES, IN_FEATURES), jnp.float32, -bound, bound)
    b = jax.random.uniform(kb, (OUT_FEATURES,), jnp.float32, -bound, bound)
    return w, b


def reference_forward(x, w, b):
    # Matches the kernel's numerics (bf16 operands, f32 MXU accumulation);
    # remaining delta vs. the kernel is only accumulation order.
    logits = jnp.dot(x.astype(jnp.bfloat16), w.T.astype(jnp.bfloat16),
                     preferred_element_type=jnp.float32) + b[None, :]
    act = jnp.where(logits >= 0, logits, 0.01 * logits)
    return jax.nn.softmax(act, axis=1)


if __name__ == "__main__":
    key = jax.random.PRNGKey(0)
    k_params, k_x = jax.random.split(key)
    w, b = init_params(k_params)
    fwd = jax.jit(qnet_forward)

    # Small primary example (a single RL inference step).
    x = jax.random.normal(k_x, (8, IN_FEATURES), jnp.float32)
    out = jax.block_until_ready(fwd(x, w, b))
    ref = reference_forward(x, w, b)
    assert out.shape == (8, OUT_FEATURES)
    assert jnp.allclose(out, ref, atol=2e-3, rtol=2e-3)
    assert jnp.allclose(jnp.sum(out, axis=1), jnp.ones((8,)), atol=1e-3)

    # Ragged batch (B not a multiple of the sublane/tile size).
    x13 = jax.random.normal(jax.random.PRNGKey(1), (13, IN_FEATURES), jnp.float32)
    out13 = jax.block_until_ready(fwd(x13, w, b))
    assert out13.shape == (13, OUT_FEATURES)
    assert jnp.allclose(out13, reference_forward(x13, w, b), atol=2e-3, rtol=2e-3)

    # Multi-tile grid with a ragged last block (exercises the parallel axis).
    x_mt = jax.random.normal(jax.random.PRNGKey(2), (1030, IN_FEATURES), jnp.float32)
    out_mt = jax.block_until_ready(fwd(x_mt, w, b))
    assert out_mt.shape == (1030, OUT_FEATURES)
    assert jnp.allclose(out_mt, reference_forward(x_mt, w, b), atol=2e-3, rtol=2e-3)
    assert jnp.allclose(jnp.sum(out_mt, axis=1), jnp.ones((1030,)), atol=1e-3)

    print("KERNEL_OK")
</pallas_src>

<mosaic_0001>
module attributes {stable_mosaic.version = 11 : i64} {
  func.func @qnet_kernel(%arg0: i32, %arg1: memref<256x430xf32, #tpu.memory_space<vmem>>, %arg2: memref<16x430xbf16, #tpu.memory_space<vmem>>, %arg3: memref<3x1xf32, #tpu.memory_space<vmem>>, %arg4: memref<3x256xf32, #tpu.memory_space<vmem>>) attributes {dimension_semantics = [#tpu.dimension_semantics<parallel>], iteration_bounds = array<i64: 1>, scalar_prefetch = 0 : i64, scratch_operands = 0 : i64, tpu.core_type = #tpu.core_type<tc>, window_params = [{transform_indices = @transform_0, window_bounds = array<i64: 256, 430>}, {pipeline_mode = #tpu.pipeline_mode<synchronous>, transform_indices = @transform_1, window_bounds = array<i64: 16, 430>}, {pipeline_mode = #tpu.pipeline_mode<synchronous>, transform_indices = @transform_2, window_bounds = array<i64: 3, 1>}, {transform_indices = @transform_3, window_bounds = array<i64: 3, 256>}]} {
    %c0 = arith.constant 0 : index
    %c0_0 = arith.constant 0 : index
    %0 = vector.load %arg1[%c0, %c0_0] : memref<256x430xf32, #tpu.memory_space<vmem>>, vector<256x430xf32>
    %1 = arith.truncf %0 : vector<256x430xf32> to vector<256x430xbf16>
    %c0_1 = arith.constant 0 : index
    %c0_2 = arith.constant 0 : index
    %2 = vector.load %arg2[%c0_1, %c0_2] : memref<16x430xbf16, #tpu.memory_space<vmem>>, vector<16x430xbf16>
    %cst = arith.constant dense<0.000000e+00> : vector<16x256xf32>
    %3 = tpu.matmul %2, %1, %cst {dimension_numbers = #tpu.dot_dimension_numbers<[1], [1], [0], [0], [0, 0, 1, 0], [], []>} : vector<16x430xbf16>, vector<256x430xbf16>, vector<16x256xf32> -> vector<16x256xf32>
    %4 = vector.extract_strided_slice %3 {offsets = [0, 0], sizes = [3, 256], strides = [1, 1]} : vector<16x256xf32> to vector<3x256xf32>
    %c0_3 = arith.constant 0 : index
    %c0_4 = arith.constant 0 : index
    %5 = vector.load %arg3[%c0_3, %c0_4] : memref<3x1xf32, #tpu.memory_space<vmem>>, vector<3x1xf32>
    %6 = vector.broadcast %5 : vector<3x1xf32> to vector<3x256xf32>
    %7 = arith.addf %4, %6 : vector<3x256xf32>
    %cst_5 = arith.constant 0.000000e+00 : f32
    %8 = vector.broadcast %cst_5 : f32 to vector<3x256xf32>
    %9 = arith.cmpf oge, %7, %8 : vector<3x256xf32>
    %cst_6 = arith.constant 0.00999999977 : f32
    %10 = vector.broadcast %cst_6 : f32 to vector<3x256xf32>
    %11 = arith.mulf %10, %7 : vector<3x256xf32>
    %12 = arith.select %9, %7, %11 : vector<3x256xi1>, vector<3x256xf32>
    %cst_7 = arith.constant dense<0xFF800000> : vector<256xf32>
    %13 = vector.multi_reduction <maximumf>, %12, %cst_7 [0] : vector<3x256xf32> to vector<256xf32>
    %14 = vector.shape_cast %13 : vector<256xf32> to vector<1x256xf32>
    %15 = vector.broadcast %14 : vector<1x256xf32> to vector<3x256xf32>
    %16 = arith.subf %12, %15 : vector<3x256xf32>
    %17 = math.exp %16 : vector<3x256xf32>
    %cst_8 = arith.constant dense<0.000000e+00> : vector<256xf32>
    %18 = vector.multi_reduction <add>, %17, %cst_8 [0] : vector<3x256xf32> to vector<256xf32>
    %19 = vector.shape_cast %18 : vector<256xf32> to vector<1x256xf32>
    %20 = vector.broadcast %19 : vector<1x256xf32> to vector<3x256xf32>
    %21 = arith.divf %17, %20 : vector<3x256xf32>
    %c0_9 = arith.constant 0 : index
    %c0_10 = arith.constant 0 : index
    %22 = vector.load %arg4[%c0_9, %c0_10] : memref<3x256xf32, #tpu.memory_space<vmem>>, vector<3x256xf32>
    tpu.vector_store %arg4[%c0_9, %c0_10], %21 {strides = array<i32>} : memref<3x256xf32, #tpu.memory_space<vmem>>, vector<3x256xf32>,
    return
  }
  func.func @transform_0(%arg0: i32) -> (i32, i32) {
    %c0_i32 = arith.constant 0 : i32
    %c0_i32_0 = arith.constant 0 : i32
    return %arg0, %c0_i32 : i32, i32
  }
  func.func @transform_1(%arg0: i32) -> (i32, i32) {
    %c0_i32 = arith.constant 0 : i32
    %c0_i32_0 = arith.constant 0 : i32
    %c0_i32_1 = arith.constant 0 : i32
    return %c0_i32, %c0_i32_0 : i32, i32
  }
  func.func @transform_2(%arg0: i32) -> (i32, i32) {
    %c0_i32 = arith.constant 0 : i32
    %c0_i32_0 = arith.constant 0 : i32
    %c0_i32_1 = arith.constant 0 : i32
    return %c0_i32, %c0_i32_0 : i32, i32
  }
  func.func @transform_3(%arg0: i32) -> (i32, i32) {
    %c0_i32 = arith.constant 0 : i32
    %c0_i32_0 = arith.constant 0 : i32
    return %c0_i32, %arg0 : i32, i32
  }
}

</mosaic_0001>

<llo_original>
// kernel: qnet_forward.1
$region0: #{qnet_forward.1}
  #allocation0 [shape = 'u32[]', space=smem, size = 0x4, offset = 0x4, fixed_abs, tag = 'smem constant byte address 0x4 - core index']
  #allocation1 [shape = 'u32[144,128]{1,0:T(1,128)}', space=vmem, size = 0x12000, scoped, tag = 'internal scratch']
  %s0 = inlined_call_operand.vmem [shape: f32[8,430], index: 0, kind: input, shape index: {}]
  %s1 = inlined_call_operand.vmem [shape: bf16[16,430], index: 1, kind: input, shape index: {}]
  %s2 = inlined_call_operand.vmem [shape: f32[3,1], index: 2, kind: input, shape index: {}]
  %s3 = inlined_call_operand.hbm [shape: f32[3,8], index: 3, kind: output, shape index: {}]
  %s4 = sld [smem:[#allocation0]]
  $region22: #{qnet_forward.1} parent=0
    _
  %s6 = ssub.s32 1, %s4
  %s7 = scalar_select 0, %s6, %s4
  $region1: #{qnet_forward.1} parent=0
    #allocation2 [shape = 'u8[4096]{0}', space=vmem, size = 0x1000, scoped, tag = 'output window, operand 0, single buffered']
    #allocation3 [shape = 's32[1]{0}', space=sflag, size = 0x4, scoped, tag = 'scoped memory for qnet_forward.1']
    %8 = vsyncpa [#allocation3], 0
    // Predicated region
    $region2: #{qnet_forward.1} parent=1 // pred_check
      _
    $region3: #{qnet_forward.1} parent=1 // pred_check_branch
      %10 = sbr.rel (0) target = $region5
    $region4: #{qnet_forward.1} parent=1 // pred_region
      _
    $region5: #{qnet_forward.1} parent=1 // pred_fallthru
      _
    // Predicated region
    $region6: #{qnet_forward.1} parent=1 // pred_check
      _
    $region7: #{qnet_forward.1} parent=1 // pred_check_branch
      %12 = sbr.rel (0) target = $region9
    $region8: #{qnet_forward.1} parent=1 // pred_region
      _
    $region9: #{qnet_forward.1} parent=1 // pred_fallthru
      _
    // Predicated region
    $region10: #{qnet_forward.1} parent=1 // pred_check
      _
    $region11: #{qnet_forward.1} parent=1 // pred_check_branch
      %14 = sbr.rel (0) target = $region13
    $region12: #{qnet_forward.1} parent=1 // pred_region
      _
    $region13: #{qnet_forward.1} parent=1 // pred_fallthru
      _
    %v15 = vld [vmem:[%s0] sm:$0xff]
    %v16 = vld [vmem:[%s0 + $0x8] sm:$0xff]
    %v17 = vld [vmem:[%s0 + $0x10] sm:$0xff]
    %v18 = vld [vmem:[%s0 + $0x18] sm:$0xff]
    %v19 = vld [vmem:[%s0 + $0x20] sm:$0xff]
    %v20 = vld [vmem:[%s0 + $0x28] sm:$0xff]
    %v21 = vld [vmem:[%s0 + $0x30] sm:$0xff]
    %v22 = vld [vmem:[%s0 + $0x38] sm:$0xff]
    %v23 = vld [vmem:[%s0 + $0x40] sm:$0xff]
    %v24 = vld [vmem:[%s0 + $0x48] sm:$0xff]
    %v25 = vld [vmem:[%s0 + $0x50] sm:$0xff]
    %v26 = vld [vmem:[%s0 + $0x58] sm:$0xff]
    %v27 = vld [vmem:[%s0 + $0x60] sm:$0xff]
    %v28 = vld [vmem:[%s0 + $0x68] sm:$0xff]
    %v29 = vld [vmem:[%s0 + $0x70] sm:$0xff]
    %v30 = vld [vmem:[%s0 + $0x78] sm:$0xff]
    %v31 = vld [vmem:[%s0 + $0x80] sm:$0xff]
    %v32 = vld [vmem:[%s0 + $0x88] sm:$0xff]
    %v33 = vld [vmem:[%s0 + $0x90] sm:$0xff]
    %v34 = vld [vmem:[%s0 + $0x98] sm:$0xff]
    %v35 = vld [vmem:[%s0 + $0xa0] sm:$0xff]
    %v36 = vld [vmem:[%s0 + $0xa8] sm:$0xff]
    %v37 = vld [vmem:[%s0 + $0xb0] sm:$0xff]
    %v38 = vld [vmem:[%s0 + $0xb8] sm:$0xff]
    %v39 = vld [vmem:[%s0 + $0xc0] sm:$0xff]
    %v40 = vld [vmem:[%s0 + $0xc8] sm:$0xff]
    %v41 = vld [vmem:[%s0 + $0xd0] sm:$0xff]
    %v42 = vld [vmem:[%s0 + $0xd8] sm:$0xff]
    %v43 = vld [vmem:[%s0 + $0xe0] sm:$0xff]
    %v44 = vld [vmem:[%s0 + $0xe8] sm:$0xff]
    %v45 = vld [vmem:[%s0 + $0xf0] sm:$0xff]
    %v46 = vld [vmem:[%s0 + $0xf8] sm:$0xff]
    %v47 = vld [vmem:[%s0 + $0x100] sm:$0xff]
    %v48 = vld [vmem:[%s0 + $0x108] sm:$0xff]
    %v49 = vld [vmem:[%s0 + $0x110] sm:$0xff]
    %v50 = vld [vmem:[%s0 + $0x118] sm:$0xff]
    %v51 = vld [vmem:[%s0 + $0x120] sm:$0xff]
    %v52 = vld [vmem:[%s0 + $0x128] sm:$0xff]
    %v53 = vld [vmem:[%s0 + $0x130] sm:$0xff]
    %v54 = vld [vmem:[%s0 + $0x138] sm:$0xff]
    %v55 = vld [vmem:[%s0 + $0x140] sm:$0xff]
    %v56 = vld [vmem:[%s0 + $0x148] sm:$0xff]
    %v57 = vld [vmem:[%s0 + $0x150] sm:$0xff]
    %v58 = vld [vmem:[%s0 + $0x158] sm:$0xff]
    %v59 = vld [vmem:[%s0 + $0x160] sm:$0xff]
    %v60 = vld [vmem:[%s0 + $0x168] sm:$0xff]
    %v61 = vld [vmem:[%s0 + $0x170] sm:$0xff]
    %v62 = vld [vmem:[%s0 + $0x178] sm:$0xff]
    %v63 = vld [vmem:[%s0 + $0x180] sm:$0xff]
    %v64 = vld [vmem:[%s0 + $0x188] sm:$0xff]
    %v65 = vld [vmem:[%s0 + $0x190] sm:$0xff]
    %v66 = vld [vmem:[%s0 + $0x198] sm:$0xff]
    %v67 = vld [vmem:[%s0 + $0x1a0] sm:$0xff]
    %v68 = vld [vmem:[%s0 + $0x1a8] sm:$0xff]
    %v69 = vld [vmem:[%s0 + $0x1b0] sm:$0xff]
    %v70 = vld [vmem:[%s0 + $0x1b8] sm:$0xff]
    %v71 = vld [vmem:[%s0 + $0x1c0] sm:$0xff]
    %v72 = vld [vmem:[%s0 + $0x1c8] sm:$0xff]
    %v73 = vld [vmem:[%s0 + $0x1d0] sm:$0xff]
    %v74 = vld [vmem:[%s0 + $0x1d8] sm:$0xff]
    %v75 = vld [vmem:[%s0 + $0x1e0] sm:$0xff]
    %v76 = vld [vmem:[%s0 + $0x1e8] sm:$0xff]
    %v77 = vld [vmem:[%s0 + $0x1f0] sm:$0xff]
    %v78 = vld [vmem:[%s0 + $0x1f8] sm:$0xff]
    %v79 = vld [vmem:[%s0 + $0x200] sm:$0xff]
    %v80 = vld [vmem:[%s0 + $0x208] sm:$0xff]
    %v81 = vld [vmem:[%s0 + $0x210] sm:$0xff]
    %v82 = vld [vmem:[%s0 + $0x218] sm:$0xff]
    %v83 = vld [vmem:[%s0 + $0x220] sm:$0xff]
    %v84 = vld [vmem:[%s0 + $0x228] sm:$0xff]
    %v85 = vld [vmem:[%s0 + $0x230] sm:$0xff]
    %v86 = vld [vmem:[%s0 + $0x238] sm:$0xff]
    %v87 = vld [vmem:[%s0 + $0x240] sm:$0xff]
    %v88 = vld [vmem:[%s0 + $0x248] sm:$0xff]
    %v89 = vld [vmem:[%s0 + $0x250] sm:$0xff]
    %v90 = vld [vmem:[%s0 + $0x258] sm:$0xff]
    %v91 = vld [vmem:[%s0 + $0x260] sm:$0xff]
    %v92 = vld [vmem:[%s0 + $0x268] sm:$0xff]
    %v93 = vld [vmem:[%s0 + $0x270] sm:$0xff]
    %v94 = vld [vmem:[%s0 + $0x278] sm:$0xff]
    %v95 = vld [vmem:[%s0 + $0x280] sm:$0xff]
    %v96 = vld [vmem:[%s0 + $0x288] sm:$0xff]
    %v97 = vld [vmem:[%s0 + $0x290] sm:$0xff]
    %v98 = vld [vmem:[%s0 + $0x298] sm:$0xff]
    %v99 = vld [vmem:[%s0 + $0x2a0] sm:$0xff]
    %v100 = vld [vmem:[%s0 + $0x2a8] sm:$0xff]
    %v101 = vld [vmem:[%s0 + $0x2b0] sm:$0xff]
    %v102 = vld [vmem:[%s0 + $0x2b8] sm:$0xff]
    %v103 = vld [vmem:[%s0 + $0x2c0] sm:$0xff]
    %v104 = vld [vmem:[%s0 + $0x2c8] sm:$0xff]
    %v105 = vld [vmem:[%s0 + $0x2d0] sm:$0xff]
    %v106 = vld [vmem:[%s0 + $0x2d8] sm:$0xff]
    %v107 = vld [vmem:[%s0 + $0x2e0] sm:$0xff]
    %v108 = vld [vmem:[%s0 + $0x2e8] sm:$0xff]
    %v109 = vld [vmem:[%s0 + $0x2f0] sm:$0xff]
    %v110 = vld [vmem:[%s0 + $0x2f8] sm:$0xff]
    %v111 = vld [vmem:[%s0 + $0x300] sm:$0xff]
    %v112 = vld [vmem:[%s0 + $0x308] sm:$0xff]
    %v113 = vld [vmem:[%s0 + $0x310] sm:$0xff]
    %v114 = vld [vmem:[%s0 + $0x318] sm:$0xff]
    %v115 = vld [vmem:[%s0 + $0x320] sm:$0xff]
    %v116 = vld [vmem:[%s0 + $0x328] sm:$0xff]
    %v117 = vld [vmem:[%s0 + $0x330] sm:$0xff]
    %v118 = vld [vmem:[%s0 + $0x338] sm:$0xff]
    %v119 = vld [vmem:[%s0 + $0x340] sm:$0xff]
    %v120 = vld [vmem:[%s0 + $0x348] sm:$0xff]
    %v121 = vld [vmem:[%s0 + $0x350] sm:$0xff]
    %v122 = vld [vmem:[%s0 + $0x358] sm:$0xff]
    %v123 = vld [vmem:[%s0 + $0x360] sm:$0xff]
    %v124 = vld [vmem:[%s0 + $0x368] sm:$0xff]
    %v125 = vld [vmem:[%s0 + $0x370] sm:$0xff]
    %v126 = vld [vmem:[%s0 + $0x378] sm:$0xff]
    %v127 = vld [vmem:[%s0 + $0x380] sm:$0xff]
    %v128 = vld [vmem:[%s0 + $0x388] sm:$0xff]
    %v129 = vld [vmem:[%s0 + $0x390] sm:$0xff]
    %v130 = vld [vmem:[%s0 + $0x398] sm:$0xff]
    %v131 = vld [vmem:[%s0 + $0x3a0] sm:$0xff]
    %v132 = vld [vmem:[%s0 + $0x3a8] sm:$0xff]
    %v133 = vld [vmem:[%s0 + $0x3b0] sm:$0xff]
    %v134 = vld [vmem:[%s0 + $0x3b8] sm:$0xff]
    %v135 = vld [vmem:[%s0 + $0x3c0] sm:$0xff]
    %v136 = vld [vmem:[%s0 + $0x3c8] sm:$0xff]
    %v137 = vld [vmem:[%s0 + $0x3d0] sm:$0xff]
    %v138 = vld [vmem:[%s0 + $0x3d8] sm:$0xff]
    %v139 = vld [vmem:[%s0 + $0x3e0] sm:$0xff]
    %v140 = vld [vmem:[%s0 + $0x3e8] sm:$0xff]
    %v141 = vld [vmem:[%s0 + $0x3f0] sm:$0xff]
    %v142 = vld [vmem:[%s0 + $0x3f8] sm:$0xff]
    %v143 = vpack.c.bf16 %v19, %v15
    %v144 = vpack.c.bf16 %v20, %v16
    %v145 = vpack.c.bf16 %v21, %v17
    %v146 = vpack.c.bf16 %v22, %v18
    %v147 = vpack.c.bf16 %v27, %v23
    %v148 = vpack.c.bf16 %v28, %v24
    %v149 = vpack.c.bf16 %v29, %v25
    %v150 = vpack.c.bf16 %v30, %v26
    %v151 = vpack.c.bf16 %v35, %v31
    %v152 = vpack.c.bf16 %v36, %v32
    %v153 = vpack.c.bf16 %v37, %v33
    %v154 = vpack.c.bf16 %v38, %v34
    %v155 = vpack.c.bf16 %v43, %v39
    %v156 = vpack.c.bf16 %v44, %v40
    %v157 = vpack.c.bf16 %v45, %v41
    %v158 = vpack.c.bf16 %v46, %v42
    %v159 = vpack.c.bf16 %v51, %v47
    %v160 = vpack.c.bf16 %v52, %v48
    %v161 = vpack.c.bf16 %v53, %v49
    %v162 = vpack.c.bf16 %v54, %v50
    %v163 = vpack.c.bf16 %v59, %v55
    %v164 = vpack.c.bf16 %v60, %v56
    %v165 = vpack.c.bf16 %v61, %v57
    %v166 = vpack.c.bf16 %v62, %v58
    %v167 = vpack.c.bf16 %v67, %v63
    %v168 = vpack.c.bf16 %v68, %v64
    %v169 = vpack.c.bf16 %v69, %v65
    %v170 = vpack.c.bf16 %v70, %v66
    %v171 = vpack.c.bf16 %v75, %v71
    %v172 = vpack.c.bf16 %v76, %v72
    %v173 = vpack.c.bf16 %v77, %v73
    %v174 = vpack.c.bf16 %v78, %v74
    %v175 = vpack.c.bf16 %v83, %v79
    %v176 = vpack.c.bf16 %v84, %v80
    %v177 = vpack.c.bf16 %v85, %v81
    %v178 = vpack.c.bf16 %v86, %v82
    %v179 = vpack.c.bf16 %v91, %v87
    %v180 = vpack.c.bf16 %v92, %v88
    %v181 = vpack.c.bf16 %v93, %v89
    %v182 = vpack.c.bf16 %v94, %v90
    %v183 = vpack.c.bf16 %v99, %v95
    %v184 = vpack.c.bf16 %v100, %v96
    %v185 = vpack.c.bf16 %v101, %v97
    %v186 = vpack.c.bf16 %v102, %v98
    %v187 = vpack.c.bf16 %v107, %v103
    %v188 = vpack.c.bf16 %v108, %v104
    %v189 = vpack.c.bf16 %v109, %v105
    %v190 = vpack.c.bf16 %v110, %v106
    %v191 = vpack.c.bf16 %v115, %v111
    %v192 = vpack.c.bf16 %v116, %v112
    %v193 = vpack.c.bf16 %v117, %v113
    %v194 = vpack.c.bf16 %v118, %v114
    %v195 = vpack.c.bf16 %v123, %v119
    %v196 = vpack.c.bf16 %v124, %v120
    %v197 = vpack.c.bf16 %v125, %v121
    %v198 = vpack.c.bf16 %v126, %v122
    %v199 = vpack.c.bf16 %v131, %v127
    %v200 = vpack.c.bf16 %v132, %v128
    %v201 = vpack.c.bf16 %v133, %v129
    %v202 = vpack.c.bf16 %v134, %v130
    %v203 = vpack.c.bf16 %v139, %v135
    %v204 = vpack.c.bf16 %v140, %v136
    %v205 = vpack.c.bf16 %v141, %v137
    %v206 = vpack.c.bf16 %v142, %v138
    %v207 = vld [vmem:[%s1] sm:$0xff]
    %v208 = vld [vmem:[%s1 + $0x8] sm:$0xff]
    %v209 = vld [vmem:[%s1 + $0x10] sm:$0xff]
    %v210 = vld [vmem:[%s1 + $0x18] sm:$0xff]
    %v215 = vunpack.c.l.b16 %v207
    %v216 = vunpack.c.h.b16 %v207
    %v217 = vunpack.c.l.b16 %v208
    %v218 = vunpack.c.h.b16 %v208
    %v219 = vunpack.c.l.b16 %v209
    %v220 = vunpack.c.h.b16 %v209
    %v221 = vunpack.c.l.b16 %v210
    %v222 = vunpack.c.h.b16 %v210
    %v223 = vpack.c.b16 %v219, %v215
    %v224 = vpack.c.b16 %v220, %v216
    %v225 = vpack.c.b16 %v221, %v217
    %v226 = vpack.c.b16 %v222, %v218
    %vm230 = vcmask 375808
    %v232 = vsel %vm230, %v226, 0
    %v235 = vsel %vm230, %v146, 0
    %v238 = vsel %vm230, %v150, 0
    %v241 = vsel %vm230, %v154, 0
    %v244 = vsel %vm230, %v158, 0
    %v247 = vsel %vm230, %v162, 0
    %v250 = vsel %vm230, %v166, 0
    %v253 = vsel %vm230, %v170, 0
    %v256 = vsel %vm230, %v174, 0
    %v259 = vsel %vm230, %v178, 0
    %v262 = vsel %vm230, %v182, 0
    %v265 = vsel %vm230, %v186, 0
    %v268 = vsel %vm230, %v190, 0
    %v271 = vsel %vm230, %v194, 0
    %v274 = vsel %vm230, %v198, 0
    %v277 = vsel %vm230, %v202, 0
    %v280 = vsel %vm230, %v206, 0
    %282 = vmatprep.subr.bf16.mxu0 %v144
    %283 = vmatpush1.bf16.xpose.msra.mxu0 %v143
    %284 = vmatprep.subr.bf16.mxu0 %v148
    %285 = vmatpush1.bf16.xpose.msra.mxu0 %v147
    %286 = vmatprep.subr.bf16.mxu0 %v152
    %287 = vmatpush1.bf16.xpose.msra.mxu0 %v151
    %288 = vmatprep.subr.bf16.mxu0 %v156
    %289 = vmatpush1.bf16.xpose.msra.mxu0 %v155
    %290 = vmatprep.subr.bf16.mxu0 %v160
    %291 = vmatpush1.bf16.xpose.msra.mxu0 %v159
    %292 = vmatprep.subr.bf16.mxu0 %v164
    %293 = vmatpush1.bf16.xpose.msra.mxu0 %v163
    %294 = vmatprep.subr.bf16.mxu0 %v168
    %295 = vmatpush1.bf16.xpose.msra.mxu0 %v167
    %296 = vmatprep.subr.bf16.mxu0 %v172
    %297 = vmatpush1.bf16.xpose.msra.mxu0 %v171
    %298 = vmatprep.subr.bf16.mxu0 %v176
    %299 = vmatpush1.bf16.xpose.msra.mxu0 %v175
    %300 = vmatprep.subr.bf16.mxu0 %v180
    %301 = vmatpush1.bf16.xpose.msra.mxu0 %v179
    %302 = vmatprep.subr.bf16.mxu0 %v184
    %303 = vmatpush1.bf16.xpose.msra.mxu0 %v183
    %304 = vmatprep.subr.bf16.mxu0 %v188
    %305 = vmatpush1.bf16.xpose.msra.mxu0 %v187
    %306 = vmatprep.subr.bf16.mxu0 %v192
    %307 = vmatpush1.bf16.xpose.msra.mxu0 %v191
    %308 = vmatprep.subr.bf16.mxu0 %v196
    %309 = vmatpush1.bf16.xpose.msra.mxu0 %v195
    %310 = vmatprep.subr.bf16.mxu0 %v200
    %311 = vmatpush1.bf16.xpose.msra.mxu0 %v199
    %312 = vmatprep.subr.bf16.mxu0 %v204
    %313 = vmatpush1.bf16.xpose.msra.mxu0 %v203
    %314 = vmatprep.mubr.bf16.mxu0 %v224
    %315 = vmatmul.mubr.bf16.gmra.mrb[0].mxu0 %v223
    %v316 = vpop.f32.mrb[0].mxu0
    %v317 = vadd.f32 0.0, %v316
    %v318 = vpop.f32.mrb[0].mxu0
    %v319 = vadd.f32 0.0, %v318
    %v320 = vpop.f32.mrb[0].mxu0
    %v321 = vpop.f32.mrb[0].mxu0
    %322 = vdwg.mxu0
    %323 = vmatprep.subr.bf16.mxu0 %v235
    %324 = vmatpush1.bf16.xpose.msra.mxu0 %v145
    %325 = vmatprep.subr.bf16.mxu0 %v238
    %326 = vmatpush1.bf16.xpose.msra.mxu0 %v149
    %327 = vmatprep.subr.bf16.mxu0 %v241
    %328 = vmatpush1.bf16.xpose.msra.mxu0 %v153
    %329 = vmatprep.subr.bf16.mxu0 %v244
    %330 = vmatpush1.bf16.xpose.msra.mxu0 %v157
    %331 = vmatprep.subr.bf16.mxu0 %v247
    %332 = vmatpush1.bf16.xpose.msra.mxu0 %v161
    %333 = vmatprep.subr.bf16.mxu0 %v250
    %334 = vmatpush1.bf16.xpose.msra.mxu0 %v165
    %335 = vmatprep.subr.bf16.mxu0 %v253
    %336 = vmatpush1.bf16.xpose.msra.mxu0 %v169
    %337 = vmatprep.subr.bf16.mxu0 %v256
    %338 = vmatpush1.bf16.xpose.msra.mxu0 %v173
    %339 = vmatprep.subr.bf16.mxu0 %v259
    %340 = vmatpush1.bf16.xpose.msra.mxu0 %v177
    %341 = vmatprep.subr.bf16.mxu0 %v262
    %342 = vmatpush1.bf16.xpose.msra.mxu0 %v181
    %343 = vmatprep.subr.bf16.mxu0 %v265
    %344 = vmatpush1.bf16.xpose.msra.mxu0 %v185
    %345 = vmatprep.subr.bf16.mxu0 %v268
    %346 = vmatpush1.bf16.xpose.msra.mxu0 %v189
    %347 = vmatprep.subr.bf16.mxu0 %v271
    %348 = vmatpush1.bf16.xpose.msra.mxu0 %v193
    %349 = vmatprep.subr.bf16.mxu0 %v274
    %350 = vmatpush1.bf16.xpose.msra.mxu0 %v197
    %351 = vmatprep.subr.bf16.mxu0 %v277
    %352 = vmatpush1.bf16.xpose.msra.mxu0 %v201
    %353 = vmatprep.subr.bf16.mxu0 %v280
    %354 = vmatpush1.bf16.xpose.msra.mxu0 %v205
    %355 = vmatprep.mubr.bf16.mxu0 %v232
    %356 = vmatmul.mubr.bf16.gmra.mrb[0].mxu0 %v225
    %v357 = vpop.f32.mrb[0].mxu0
    %v358 = vadd.f32 %v317, %v357
    %v359 = vpop.f32.mrb[0].mxu0
    %v360 = vadd.f32 %v319, %v359
    %v361 = vpop.f32.mrb[0].mxu0
    %v362 = vpop.f32.mrb[0].mxu0
    %363 = vdwg.mxu0
    %v364 = vld [vmem:[%s2] sm:$0x7]
    %366 = vset.pattern.permute.xlu0 0
    %367 = vperm.xlu0 %366, %v364
    %v368 = vpop.permute.xlu0 %367
    %v370 = vadd.f32 %v358, %v368
    %v371 = vadd.f32 %v360, %v368
    %vm372 = vcmp.ge.f32.partialorder %v370, 0.0
    %vm373 = vcmp.ge.f32.partialorder %v371, 0.0
    %v374 = vmul.f32 %v370, 0.01
    %v375 = vmul.f32 %v371, 0.01
    %v376 = vsel %vm372, %v370, %v374
    %v377 = vsel %vm373, %v371, %v375
    %vm378 = vcmask 1042432
    %v379 = vsel %vm378, %v376, -inf
    %v380 = vrot.slane %v379, 4
    %v381 = vmax.f32 %v379, %v380
    %v382 = vrot.slane %v381, 2
    %v383 = vmax.f32 %v381, %v382
    %v384 = vrot.slane %v383, 1
    %v385 = vmax.f32 %v383, %v384
    %v386 = vsel %vm378, %v377, -inf
    %v387 = vrot.slane %v386, 4
    %v388 = vmax.f32 %v386, %v387
    %v389 = vrot.slane %v388, 2
    %v390 = vmax.f32 %v388, %v389
    %v391 = vrot.slane %v390, 1
    %v392 = vmax.f32 %v390, %v391
    %v393 = vsub.f32 %v376, %v385
    %v394 = vsub.f32 %v377, %v392
    %v395 = vmul.f32 %v393, 1.442695
    %v396 = vpow.pop %v395
    %v397 = vmul.f32 %v394, 1.442695
    %v398 = vpow.pop %v397
    %v399 = vsel %vm378, %v396, 0.0
    %v400 = vrot.slane %v399, 4
    %v401 = vadd.f32 %v399, %v400
    %v402 = vrot.slane %v401, 2
    %v403 = vadd.f32 %v401, %v402
    %v404 = vrot.slane %v403, 1
    %v405 = vadd.f32 %v403, %v404
    %v406 = vsel %vm378, %v398, 0.0
    %v407 = vrot.slane %v406, 4
    %v408 = vadd.f32 %v406, %v407
    %v409 = vrot.slane %v408, 2
    %v410 = vadd.f32 %v408, %v409
    %v411 = vrot.slane %v410, 1
    %v412 = vadd.f32 %v410, %v411
    %v413 = vrcp.pop %v405
    %v414 = vmul.f32 %v396, %v413
    %v415 = vrcp.pop %v412
    %v416 = vmul.f32 %v398, %v415
    %v419 = vcombine.low %v414, %v416
    %421 = vst [vmem:[#allocation2] sm:$0x77] %v419
    // Predicated region
    $region14: #{qnet_forward.1} parent=1 // pred_check
      _
    $region15: #{qnet_forward.1} parent=1 // pred_check_branch
      %423 = sbr.rel (0) target = $region17
    $region16: #{qnet_forward.1} parent=1 // pred_region
      %s425 = ssub.s32 128, 64
      %426 = vsyncadd [#allocation3], %s425
      %s428 = sshll.u32 [#allocation2], 4
      %s429 = int_to_ptr.vmem [resolvable:$true] %s428
      %431 = dma.vmem_to_hbm [thread:$0]  %s429, 64, %s3, [#allocation3]
    $region17: #{qnet_forward.1} parent=1 // pred_fallthru
      _
    // Predicated region
    $region18: #{qnet_forward.1} parent=1 // pred_check
      _
    $region19: #{qnet_forward.1} parent=1 // pred_check_branch
      %433 = sbr.rel (0) target = $region21
    $region20: #{qnet_forward.1} parent=1 // pred_region
      %434 = dma.done [#allocation3], 128
    $region21: #{qnet_forward.1} parent=1 // pred_fallthru
      _
    %435 = vsyncpa [#allocation3], 1

</llo_original>
